<compile_context>
chip_gen: v5e
topology: v5e:2x2
jax: 0.10.0
libtpu: 0.0.40
codegen_flags: <defaults>
</compile_context>

<pallas_src>
import jax
import jax.numpy as jnp
from jax.experimental import pallas as pl
from jax.experimental.pallas import tpu as pltpu


# ------------------------------ helpers --------------------------------------
def _round_up(x: int, m: int) -> int:
    return -(-x // m) * m


def _choose_tm(M: int) -> int:
    """Rows per grid step along M."""
    if M <= 512:
        # Tiny problem: single step; round the tile to the bf16 sublane tile (16).
        return max(16, _round_up(M, 16))
    # Large M: ~1024-row tiles, an even number (>= 2) of grid steps so both v7x
    # TensorCores get balanced work under dimension_semantics=("parallel",).
    steps = max(2, -(-M // 1024))
    if steps % 2:
        steps += 1
    return max(16, _round_up(-(-M // steps), 16))


def _vmem_limit_bytes(bytes_needed: int) -> int:
    """VMEM limit: enough for the kernel, capped well under physical capacity."""
    try:
        cap = int(pltpu.get_tpu_info().vmem_capacity_bytes)
    except Exception:  # query unavailable -> assume the smallest generation (v7x)
        cap = 64 * 1024 * 1024
    soft_cap = min(cap // 2, 40 * 1024 * 1024)
    want = max(bytes_needed + bytes_needed // 4 + (2 << 20), 16 << 20)
    # Never clamp below what the kernel actually needs (+ small headroom).
    return int(min(want, max(soft_cap, bytes_needed + (2 << 20))))


# ----------------------------- Pallas kernel ---------------------------------
def _patch_embed_kernel(x_ref, w_ref, b_ref, o_ref):
    # One MXU matmul per M tile; weight and bias are fully VMEM-resident.
    acc = jnp.dot(x_ref[...], w_ref[...], preferred_element_type=jnp.float32)
    o_ref[...] = (acc + b_ref[...]).astype(o_ref.dtype)


def _patch_embed_gemm(patches, w2d, bias2d, *, out_dtype):
    """patches: (M, K) bf16, w2d: (K, N) bf16, bias2d: (1, N) f32 -> (M, N)."""
    M, K = patches.shape
    _, N = w2d.shape
    tm = _choose_tm(M)
    grid = (pl.cdiv(M, tm),)

    out_itemsize = jnp.dtype(out_dtype).itemsize
    vmem_need = (
        2 * tm * K * patches.dtype.itemsize      # double-buffered patches tile
        + 2 * tm * N * out_itemsize              # double-buffered output tile
        + K * N * w2d.dtype.itemsize             # resident weight (single buffer)
        + N * 4                                  # resident bias
    )

    return pl.pallas_call(
        _patch_embed_kernel,
        out_shape=jax.ShapeDtypeStruct((M, N), out_dtype),
        grid_spec=pltpu.PrefetchScalarGridSpec(
            num_scalar_prefetch=0,
            grid=grid,
            in_specs=[
                pl.BlockSpec((tm, K), lambda i: (i, 0)),          # patches tile
                pl.BlockSpec((K, N), lambda i: (0, 0),            # weight (resident)
                             pipeline_mode=pl.Buffered(1)),
                pl.BlockSpec((1, N), lambda i: (0, 0),            # bias (resident)
                             pipeline_mode=pl.Buffered(1)),
            ],
            out_specs=pl.BlockSpec((tm, N), lambda i: (i, 0)),
        ),
        compiler_params=pltpu.CompilerParams(
            dimension_semantics=("parallel",),
            vmem_limit_bytes=_vmem_limit_bytes(vmem_need),
            # Let XLA fuse the patchify transpose/cast producer into operand 0
            # instead of materializing the patches array in HBM.
            allow_input_fusion=[True, False, False],
        ),
    )(patches, w2d, bias2d)


# ------------------------------ Module wrapper --------------------------------
class PatchEmbedPallas:
    """JAX/Pallas re-implementation of H2Crop PatchEmbed forward."""

    def __init__(self, img_size=16, patch_size=8, in_chans=4, embed_dim=128,
                 num_frames=4, tubelet_size=2, out_dtype=jnp.bfloat16, key=None):
        img_size = (img_size, img_size) if isinstance(img_size, int) else tuple(img_size)
        patch_size = (patch_size, patch_size) if isinstance(patch_size, int) else tuple(patch_size)
        self.img_size = img_size
        self.patch_size = patch_size
        self.tubelet_size = int(tubelet_size)
        self.in_chans = in_chans
        self.embed_dim = embed_dim
        self.num_frames = num_frames
        self.out_dtype = out_dtype
        self.num_patch_per_phase = (img_size[1] // patch_size[1]) * (img_size[0] // patch_size[0])
        self.num_patches = self.num_patch_per_phase * (num_frames // self.tubelet_size)

        # Deterministic parameter init (same shapes / bounds as nn.Conv3d default).
        if key is None:
            key = jax.random.PRNGKey(0)
        kw, kb = jax.random.split(key)
        wshape = (embed_dim, in_chans, self.tubelet_size, patch_size[0], patch_size[1])
        fan_in = in_chans * self.tubelet_size * patch_size[0] * patch_size[1]
        bound = float(fan_in) ** -0.5
        self.proj_weight = jax.random.uniform(kw, wshape, jnp.float32, -bound, bound)
        self.proj_bias = jax.random.uniform(kb, (embed_dim,), jnp.float32, -bound, bound)

        # Hoisted kernel operands: flatten the weight once in (dt, c, dh, dw) order
        # (matches the patchify below), cast to bf16 for the native MXU path.
        w_t = jnp.transpose(self.proj_weight, (2, 1, 3, 4, 0))  # (tub, C, ph, pw, E)
        self._w2d = w_t.reshape(-1, embed_dim).astype(jnp.bfloat16)
        self._bias2d = self.proj_bias.reshape(1, embed_dim)      # f32

        self._forward = jax.jit(self._forward_impl)

    def _forward_impl(self, x):
        B, T, C, H, W = x.shape
        tub = self.tubelet_size
        ph, pw = self.patch_size
        Tp, Hp, Wp = T // tub, H // ph, W // pw

        # Patchify directly from (B, T, C, H, W): per-patch flatten order is
        # (dt, c, dh, dw), matching the weight transpose done in __init__.
        xp = x.reshape(B, Tp, tub, C, Hp, ph, Wp, pw)
        xp = jnp.transpose(xp, (0, 1, 4, 6, 2, 3, 5, 7))  # (B,Tp,Hp,Wp,tub,C,ph,pw)
        patches = xp.reshape(B * Tp * Hp * Wp, tub * C * ph * pw).astype(jnp.bfloat16)

        out = _patch_embed_gemm(patches, self._w2d, self._bias2d,
                                out_dtype=self.out_dtype)
        return out.reshape(B, Tp * Hp * Wp, self.embed_dim)

    def __call__(self, x):
        """x: (B, T, C, H, W) -> (B, num_patches, embed_dim) in `out_dtype`."""
        H, W = x.shape[-2], x.shape[-1]
        assert H == self.img_size[0] and W == self.img_size[1], (
            f"Input image size ({H}*{W}) doesn't match model "
            f"({self.img_size[0]}*{self.img_size[1]}).")
        return self._forward(x)


# ---------------------------------- main --------------------------------------
if __name__ == "__main__":
    # Small shapes consistent with the module semantics.
    B, T, C, H, W = 2, 4, 4, 16, 16
    patch, tub, E = 8, 2, 128

    key = jax.random.PRNGKey(0)
    kx, kp = jax.random.split(key)
    x = jax.random.normal(kx, (B, T, C, H, W), jnp.float32)

    mod = PatchEmbedPallas(img_size=H, patch_size=patch, in_chans=C,
                           embed_dim=E, num_frames=T, tubelet_size=tub, key=kp)

    out = jax.block_until_ready(mod(x))
    assert out.shape == (B, mod.num_patches, E), out.shape

    # Reference: real f32 3-D convolution (stride == kernel) via lax, then
    # flatten(2).transpose(1,2) semantics, as in the PyTorch module.
    x_ncthw = jnp.transpose(x, (0, 2, 1, 3, 4))
    conv = jax.lax.conv_general_dilated(
        x_ncthw, mod.proj_weight,
        window_strides=(tub, patch, patch), padding="VALID",
        dimension_numbers=("NCDHW", "OIDHW", "NCDHW"),
    ) + mod.proj_bias.reshape(1, E, 1, 1, 1)
    ref = jnp.transpose(conv.reshape(B, E, -1), (0, 2, 1))

    # bf16 inputs + bf16 output with f32 accumulation -> loosened tolerance.
    out_f32 = out.astype(jnp.float32)
    max_err = float(jnp.max(jnp.abs(out_f32 - ref)))
    assert jnp.allclose(out_f32, ref, atol=4e-2, rtol=4e-2), max_err
    print("KERNEL_OK")
</pallas_src>

<mosaic_0001>
module attributes {stable_mosaic.version = 11 : i64} {
  func.func @_patch_embed_kernel(%arg0: i32, %arg1: memref<16x512xbf16, #tpu.memory_space<vmem>>, %arg2: memref<512x128xbf16, #tpu.memory_space<vmem>>, %arg3: memref<1x128xf32, #tpu.memory_space<vmem>>, %arg4: memref<16x128xbf16, #tpu.memory_space<vmem>>) attributes {dimension_semantics = [#tpu.dimension_semantics<parallel>], iteration_bounds = array<i64: 1>, scalar_prefetch = 0 : i64, scratch_operands = 0 : i64, tpu.core_type = #tpu.core_type<tc>, window_params = [{transform_indices = @transform_0, window_bounds = array<i64: 16, 512>}, {pipeline_mode = #tpu.pipeline_mode<synchronous>, transform_indices = @transform_1, window_bounds = array<i64: 512, 128>}, {pipeline_mode = #tpu.pipeline_mode<synchronous>, transform_indices = @transform_2, window_bounds = array<i64: 1, 128>}, {transform_indices = @transform_3, window_bounds = array<i64: 16, 128>}]} {
    %c0 = arith.constant 0 : index
    %c0_0 = arith.constant 0 : index
    %0 = vector.load %arg1[%c0, %c0_0] : memref<16x512xbf16, #tpu.memory_space<vmem>>, vector<16x512xbf16>
    %c0_1 = arith.constant 0 : index
    %c0_2 = arith.constant 0 : index
    %1 = vector.load %arg2[%c0_1, %c0_2] : memref<512x128xbf16, #tpu.memory_space<vmem>>, vector<512x128xbf16>
    %cst = arith.constant dense<0.000000e+00> : vector<16x128xf32>
    %2 = tpu.matmul %0, %1, %cst {dimension_numbers = #tpu.dot_dimension_numbers<[1], [0], [0], [1], [0, 0, 1, 1], [], []>} : vector<16x512xbf16>, vector<512x128xbf16>, vector<16x128xf32> -> vector<16x128xf32>
    %c0_3 = arith.constant 0 : index
    %c0_4 = arith.constant 0 : index
    %3 = vector.load %arg3[%c0_3, %c0_4] : memref<1x128xf32, #tpu.memory_space<vmem>>, vector<1x128xf32>
    %4 = vector.broadcast %3 : vector<1x128xf32> to vector<16x128xf32>
    %5 = arith.addf %2, %4 : vector<16x128xf32>
    %6 = arith.truncf %5 : vector<16x128xf32> to vector<16x128xbf16>
    %c0_5 = arith.constant 0 : index
    %c0_6 = arith.constant 0 : index
    %7 = vector.load %arg4[%c0_5, %c0_6] : memref<16x128xbf16, #tpu.memory_space<vmem>>, vector<16x128xbf16>
    tpu.vector_store %arg4[%c0_5, %c0_6], %6 {strides = array<i32>} : memref<16x128xbf16, #tpu.memory_space<vmem>>, vector<16x128xbf16>,
    return
  }
  func.func @transform_0(%arg0: i32) -> (i32, i32) {
    %c0_i32 = arith.constant 0 : i32
    %c0_i32_0 = arith.constant 0 : i32
    return %arg0, %c0_i32 : i32, i32
  }
  func.func @transform_1(%arg0: i32) -> (i32, i32) {
    %c0_i32 = arith.constant 0 : i32
    %c0_i32_0 = arith.constant 0 : i32
    %c0_i32_1 = arith.constant 0 : i32
    return %c0_i32, %c0_i32_0 : i32, i32
  }
  func.func @transform_2(%arg0: i32) -> (i32, i32) {
    %c0_i32 = arith.constant 0 : i32
    %c0_i32_0 = arith.constant 0 : i32
    %c0_i32_1 = arith.constant 0 : i32
    return %c0_i32, %c0_i32_0 : i32, i32
  }
  func.func @transform_3(%arg0: i32) -> (i32, i32) {
    %c0_i32 = arith.constant 0 : i32
    %c0_i32_0 = arith.constant 0 : i32
    return %arg0, %c0_i32 : i32, i32
  }
}

</mosaic_0001>

<llo_original>
// kernel: _forward_impl.1
$region0: #{_forward_impl.1}
  #allocation0 [shape = 'u32[]', space=smem, size = 0x4, offset = 0x4, fixed_abs, tag = 'smem constant byte address 0x4 - core index']
  #allocation1 [shape = 'u32[72,128]{1,0:T(1,128)}', space=vmem, size = 0x9000, scoped, tag = 'internal scratch']
  %s0 = inlined_call_operand.vmem [shape: bf16[16,512], index: 0, kind: input, shape index: {}]
  %s1 = inlined_call_operand.vmem [shape: bf16[512,128], index: 1, kind: input, shape index: {}]
  %s2 = inlined_call_operand.vmem [shape: f32[1,128], index: 2, kind: input, shape index: {}]
  %s3 = inlined_call_operand.hbm [shape: bf16[16,128], index: 3, kind: output, shape index: {}]
  %s4 = sld [smem:[#allocation0]]
  $region22: #{_forward_impl.1} parent=0
    _
  %s6 = ssub.s32 1, %s4
  %s7 = scalar_select 0, %s6, %s4
  $region1: #{_forward_impl.1} parent=0
    #allocation2 [shape = 'u8[4096]{0}', space=vmem, size = 0x1000, scoped, tag = 'output window, operand 0, single buffered']
    #allocation3 [shape = 's32[1]{0}', space=sflag, size = 0x4, scoped, tag = 'scoped memory for _forward_impl.1']
    %8 = vsyncpa [#allocation3], 0
    // Predicated region
    $region2: #{_forward_impl.1} parent=1 // pred_check
      _
    $region3: #{_forward_impl.1} parent=1 // pred_check_branch
      %10 = sbr.rel (0) target = $region5
    $region4: #{_forward_impl.1} parent=1 // pred_region
      _
    $region5: #{_forward_impl.1} parent=1 // pred_fallthru
      _
    // Predicated region
    $region6: #{_forward_impl.1} parent=1 // pred_check
      _
    $region7: #{_forward_impl.1} parent=1 // pred_check_branch
      %12 = sbr.rel (0) target = $region9
    $region8: #{_forward_impl.1} parent=1 // pred_region
      _
    $region9: #{_forward_impl.1} parent=1 // pred_fallthru
      _
    // Predicated region
    $region10: #{_forward_impl.1} parent=1 // pred_check
      _
    $region11: #{_forward_impl.1} parent=1 // pred_check_branch
      %14 = sbr.rel (0) target = $region13
    $region12: #{_forward_impl.1} parent=1 // pred_region
      _
    $region13: #{_forward_impl.1} parent=1 // pred_fallthru
      _
    %v15 = vld [vmem:[%s0] sm:$0xff]
    %v16 = vld [vmem:[%s0 + $0x8] sm:$0xff]
    %v17 = vld [vmem:[%s0 + $0x10] sm:$0xff]
    %v18 = vld [vmem:[%s0 + $0x18] sm:$0xff]
    %v19 = vld [vmem:[%s1] sm:$0xf]
    %v20 = vld [vmem:[%s1 + $0x4] sm:$0xf]
    %v21 = vld [vmem:[%s1 + $0x8] sm:$0xf]
    %v22 = vld [vmem:[%s1 + $0xc] sm:$0xf]
    %v23 = vld [vmem:[%s1 + $0x10] sm:$0xf]
    %v24 = vld [vmem:[%s1 + $0x14] sm:$0xf]
    %v25 = vld [vmem:[%s1 + $0x18] sm:$0xf]
    %v26 = vld [vmem:[%s1 + $0x1c] sm:$0xf]
    %v27 = vld [vmem:[%s1 + $0x20] sm:$0xf]
    %v28 = vld [vmem:[%s1 + $0x24] sm:$0xf]
    %v29 = vld [vmem:[%s1 + $0x28] sm:$0xf]
    %v30 = vld [vmem:[%s1 + $0x2c] sm:$0xf]
    %v31 = vld [vmem:[%s1 + $0x30] sm:$0xf]
    %v32 = vld [vmem:[%s1 + $0x34] sm:$0xf]
    %v33 = vld [vmem:[%s1 + $0x38] sm:$0xf]
    %v34 = vld [vmem:[%s1 + $0x3c] sm:$0xf]
    %v35 = vld [vmem:[%s1 + $0x40] sm:$0xf]
    %v36 = vld [vmem:[%s1 + $0x44] sm:$0xf]
    %v37 = vld [vmem:[%s1 + $0x48] sm:$0xf]
    %v38 = vld [vmem:[%s1 + $0x4c] sm:$0xf]
    %v39 = vld [vmem:[%s1 + $0x50] sm:$0xf]
    %v40 = vld [vmem:[%s1 + $0x54] sm:$0xf]
    %v41 = vld [vmem:[%s1 + $0x58] sm:$0xf]
    %v42 = vld [vmem:[%s1 + $0x5c] sm:$0xf]
    %v43 = vld [vmem:[%s1 + $0x60] sm:$0xf]
    %v44 = vld [vmem:[%s1 + $0x64] sm:$0xf]
    %v45 = vld [vmem:[%s1 + $0x68] sm:$0xf]
    %v46 = vld [vmem:[%s1 + $0x6c] sm:$0xf]
    %v47 = vld [vmem:[%s1 + $0x70] sm:$0xf]
    %v48 = vld [vmem:[%s1 + $0x74] sm:$0xf]
    %v49 = vld [vmem:[%s1 + $0x78] sm:$0xf]
    %v50 = vld [vmem:[%s1 + $0x7c] sm:$0xf]
    %v51 = vld [vmem:[%s1 + $0x80] sm:$0xf]
    %v52 = vld [vmem:[%s1 + $0x84] sm:$0xf]
    %v53 = vld [vmem:[%s1 + $0x88] sm:$0xf]
    %v54 = vld [vmem:[%s1 + $0x8c] sm:$0xf]
    %v55 = vld [vmem:[%s1 + $0x90] sm:$0xf]
    %v56 = vld [vmem:[%s1 + $0x94] sm:$0xf]
    %v57 = vld [vmem:[%s1 + $0x98] sm:$0xf]
    %v58 = vld [vmem:[%s1 + $0x9c] sm:$0xf]
    %v59 = vld [vmem:[%s1 + $0xa0] sm:$0xf]
    %v60 = vld [vmem:[%s1 + $0xa4] sm:$0xf]
    %v61 = vld [vmem:[%s1 + $0xa8] sm:$0xf]
    %v62 = vld [vmem:[%s1 + $0xac] sm:$0xf]
    %v63 = vld [vmem:[%s1 + $0xb0] sm:$0xf]
    %v64 = vld [vmem:[%s1 + $0xb4] sm:$0xf]
    %v65 = vld [vmem:[%s1 + $0xb8] sm:$0xf]
    %v66 = vld [vmem:[%s1 + $0xbc] sm:$0xf]
    %v67 = vld [vmem:[%s1 + $0xc0] sm:$0xf]
    %v68 = vld [vmem:[%s1 + $0xc4] sm:$0xf]
    %v69 = vld [vmem:[%s1 + $0xc8] sm:$0xf]
    %v70 = vld [vmem:[%s1 + $0xcc] sm:$0xf]
    %v71 = vld [vmem:[%s1 + $0xd0] sm:$0xf]
    %v72 = vld [vmem:[%s1 + $0xd4] sm:$0xf]
    %v73 = vld [vmem:[%s1 + $0xd8] sm:$0xf]
    %v74 = vld [vmem:[%s1 + $0xdc] sm:$0xf]
    %v75 = vld [vmem:[%s1 + $0xe0] sm:$0xf]
    %v76 = vld [vmem:[%s1 + $0xe4] sm:$0xf]
    %v77 = vld [vmem:[%s1 + $0xe8] sm:$0xf]
    %v78 = vld [vmem:[%s1 + $0xec] sm:$0xf]
    %v79 = vld [vmem:[%s1 + $0xf0] sm:$0xf]
    %v80 = vld [vmem:[%s1 + $0xf4] sm:$0xf]
    %v81 = vld [vmem:[%s1 + $0xf8] sm:$0xf]
    %v82 = vld [vmem:[%s1 + $0xfc] sm:$0xf]
    %v83 = vld [vmem:[%s2] sm:$0x1]
    %v85 = vperm.slane %v83, 0
    %v91 = vunpack.c.l.b16 %v15
    %v92 = vunpack.c.h.b16 %v15
    %v93 = vunpack.c.l.b16 %v16
    %v94 = vunpack.c.h.b16 %v16
    %v95 = vunpack.c.l.b16 %v17
    %v96 = vunpack.c.h.b16 %v17
    %v97 = vunpack.c.l.b16 %v18
    %v98 = vunpack.c.h.b16 %v18
    %v99 = vpack.c.b16 %v95, %v91
    %v100 = vpack.c.b16 %v96, %v92
    %v101 = vpack.c.b16 %v97, %v93
    %v102 = vpack.c.b16 %v98, %v94
    %v171 = vunpack.c.l.b16 %v19
    %v172 = vunpack.c.l.b16 %v20
    %v173 = vunpack.c.l.b16 %v21
    %v174 = vunpack.c.l.b16 %v22
    %v175 = vunpack.c.l.b16 %v23
    %v176 = vunpack.c.l.b16 %v24
    %v177 = vunpack.c.l.b16 %v25
    %v178 = vunpack.c.l.b16 %v26
    %v179 = vunpack.c.l.b16 %v27
    %v180 = vunpack.c.l.b16 %v28
    %v181 = vunpack.c.l.b16 %v29
    %v182 = vunpack.c.l.b16 %v30
    %v183 = vunpack.c.l.b16 %v31
    %v184 = vunpack.c.l.b16 %v32
    %v185 = vunpack.c.l.b16 %v33
    %v186 = vunpack.c.l.b16 %v34
    %v187 = vunpack.c.l.b16 %v35
    %v188 = vunpack.c.l.b16 %v36
    %v189 = vunpack.c.l.b16 %v37
    %v190 = vunpack.c.l.b16 %v38
    %v191 = vunpack.c.l.b16 %v39
    %v192 = vunpack.c.l.b16 %v40
    %v193 = vunpack.c.l.b16 %v41
    %v194 = vunpack.c.l.b16 %v42
    %v195 = vunpack.c.l.b16 %v43
    %v196 = vunpack.c.l.b16 %v44
    %v197 = vunpack.c.l.b16 %v45
    %v198 = vunpack.c.l.b16 %v46
    %v199 = vunpack.c.l.b16 %v47
    %v200 = vunpack.c.l.b16 %v48
    %v201 = vunpack.c.l.b16 %v49
    %v202 = vunpack.c.l.b16 %v50
    %v203 = vunpack.c.l.b16 %v51
    %v204 = vunpack.c.l.b16 %v52
    %v205 = vunpack.c.l.b16 %v53
    %v206 = vunpack.c.l.b16 %v54
    %v207 = vunpack.c.l.b16 %v55
    %v208 = vunpack.c.l.b16 %v56
    %v209 = vunpack.c.l.b16 %v57
    %v210 = vunpack.c.l.b16 %v58
    %v211 = vunpack.c.l.b16 %v59
    %v212 = vunpack.c.l.b16 %v60
    %v213 = vunpack.c.l.b16 %v61
    %v214 = vunpack.c.l.b16 %v62
    %v215 = vunpack.c.l.b16 %v63
    %v216 = vunpack.c.l.b16 %v64
    %v217 = vunpack.c.l.b16 %v65
    %v218 = vunpack.c.l.b16 %v66
    %v219 = vunpack.c.l.b16 %v67
    %v220 = vunpack.c.l.b16 %v68
    %v221 = vunpack.c.l.b16 %v69
    %v222 = vunpack.c.l.b16 %v70
    %v223 = vunpack.c.l.b16 %v71
    %v224 = vunpack.c.l.b16 %v72
    %v225 = vunpack.c.l.b16 %v73
    %v226 = vunpack.c.l.b16 %v74
    %v227 = vunpack.c.l.b16 %v75
    %v228 = vunpack.c.l.b16 %v76
    %v229 = vunpack.c.l.b16 %v77
    %v230 = vunpack.c.l.b16 %v78
    %v231 = vunpack.c.l.b16 %v79
    %v232 = vunpack.c.l.b16 %v80
    %v233 = vunpack.c.l.b16 %v81
    %v234 = vunpack.c.l.b16 %v82
    %v235 = vpack.c.b16 %v172, %v171
    %v236 = vpack.c.b16 %v174, %v173
    %v237 = vpack.c.b16 %v176, %v175
    %v238 = vpack.c.b16 %v178, %v177
    %v239 = vpack.c.b16 %v180, %v179
    %v240 = vpack.c.b16 %v182, %v181
    %v241 = vpack.c.b16 %v184, %v183
    %v242 = vpack.c.b16 %v186, %v185
    %v243 = vpack.c.b16 %v188, %v187
    %v244 = vpack.c.b16 %v190, %v189
    %v245 = vpack.c.b16 %v192, %v191
    %v246 = vpack.c.b16 %v194, %v193
    %v247 = vpack.c.b16 %v196, %v195
    %v248 = vpack.c.b16 %v198, %v197
    %v249 = vpack.c.b16 %v200, %v199
    %v250 = vpack.c.b16 %v202, %v201
    %v251 = vpack.c.b16 %v204, %v203
    %v252 = vpack.c.b16 %v206, %v205
    %v253 = vpack.c.b16 %v208, %v207
    %v254 = vpack.c.b16 %v210, %v209
    %v255 = vpack.c.b16 %v212, %v211
    %v256 = vpack.c.b16 %v214, %v213
    %v257 = vpack.c.b16 %v216, %v215
    %v258 = vpack.c.b16 %v218, %v217
    %v259 = vpack.c.b16 %v220, %v219
    %v260 = vpack.c.b16 %v222, %v221
    %v261 = vpack.c.b16 %v224, %v223
    %v262 = vpack.c.b16 %v226, %v225
    %v263 = vpack.c.b16 %v228, %v227
    %v264 = vpack.c.b16 %v230, %v229
    %v265 = vpack.c.b16 %v232, %v231
    %v266 = vpack.c.b16 %v234, %v233
    %299 = vmatpush.bf16.msra.mxu0 %v242
    %300 = vmatpush.bf16.msra.mxu0 %v241
    %301 = vmatpush.bf16.msra.mxu0 %v240
    %302 = vmatpush.bf16.msra.mxu0 %v239
    %303 = vmatpush.bf16.msra.mxu0 %v238
    %304 = vmatpush.bf16.msra.mxu0 %v237
    %305 = vmatpush.bf16.msra.mxu0 %v236
    %306 = vmatpush.bf16.msra.mxu0 %v235
    %307 = vmatmul.bf16.gmra.mxu0 %v99
    %v308 = vpop.f32.mrf.mxu0
    %v309 = vadd.f32 %v85, %v308
    %v310 = vpop.f32.mrf.mxu0
    %v311 = vadd.f32 %v85, %v310
    %312 = vdwg.mxu0
    %313 = vmatpush.bf16.msra.mxu0 %v250
    %314 = vmatpush.bf16.msra.mxu0 %v249
    %315 = vmatpush.bf16.msra.mxu0 %v248
    %316 = vmatpush.bf16.msra.mxu0 %v247
    %317 = vmatpush.bf16.msra.mxu0 %v246
    %318 = vmatpush.bf16.msra.mxu0 %v245
    %319 = vmatpush.bf16.msra.mxu0 %v244
    %320 = vmatpush.bf16.msra.mxu0 %v243
    %321 = vmatmul.bf16.gmra.mxu0 %v100
    %v322 = vpop.f32.mrf.mxu0
    %v323 = vadd.f32 %v309, %v322
    %v324 = vpop.f32.mrf.mxu0
    %v325 = vadd.f32 %v311, %v324
    %326 = vdwg.mxu0
    %327 = vmatpush.bf16.msra.mxu0 %v258
    %328 = vmatpush.bf16.msra.mxu0 %v257
    %329 = vmatpush.bf16.msra.mxu0 %v256
    %330 = vmatpush.bf16.msra.mxu0 %v255
    %331 = vmatpush.bf16.msra.mxu0 %v254
    %332 = vmatpush.bf16.msra.mxu0 %v253
    %333 = vmatpush.bf16.msra.mxu0 %v252
    %334 = vmatpush.bf16.msra.mxu0 %v251
    %335 = vmatmul.bf16.gmra.mxu0 %v101
    %v336 = vpop.f32.mrf.mxu0
    %v337 = vadd.f32 %v323, %v336
    %v338 = vpop.f32.mrf.mxu0
    %v339 = vadd.f32 %v325, %v338
    %340 = vdwg.mxu0
    %341 = vmatpush.bf16.msra.mxu0 %v266
    %342 = vmatpush.bf16.msra.mxu0 %v265
    %343 = vmatpush.bf16.msra.mxu0 %v264
    %344 = vmatpush.bf16.msra.mxu0 %v263
    %345 = vmatpush.bf16.msra.mxu0 %v262
    %346 = vmatpush.bf16.msra.mxu0 %v261
    %347 = vmatpush.bf16.msra.mxu0 %v260
    %348 = vmatpush.bf16.msra.mxu0 %v259
    %349 = vmatmul.bf16.gmra.mxu0 %v102
    %v350 = vpop.f32.mrf.mxu0
    %v351 = vadd.f32 %v337, %v350
    %v352 = vpop.f32.mrf.mxu0
    %v353 = vadd.f32 %v339, %v352
    %354 = vdwg.mxu0
    %v355 = vpack.c.bf16 %v351, %v351
    %v356 = vpack.c.bf16 %v353, %v353
    %357 = vst [vmem:[#allocation2] sm:$0xf] %v355
    %358 = vst [vmem:[#allocation2 + $0x4] sm:$0xf] %v356
    // Predicated region
    $region14: #{_forward_impl.1} parent=1 // pred_check
      _
    $region15: #{_forward_impl.1} parent=1 // pred_check_branch
      %360 = sbr.rel (0) target = $region17
    $region16: #{_forward_impl.1} parent=1 // pred_region
      %362 = vsyncadd [#allocation3], 0
      %s363 = sshll.u32 [#allocation2], 4
      %s364 = int_to_ptr.vmem [resolvable:$true] %s363
      %s365 = sshll.u32 %s3, 4
      %s366 = int_to_ptr.hbm [resolvable:$true] %s365
      %371 = dma.vmem_to_hbm [thread:$0]  %s364, 128, %s366, [#allocation3], 64, 64, 4
    $region17: #{_forward_impl.1} parent=1 // pred_fallthru
      _
    // Predicated region
    $region18: #{_forward_impl.1} parent=1 // pred_check
      _
    $region19: #{_forward_impl.1} parent=1 // pred_check_branch
      %373 = sbr.rel (0) target = $region21
    $region20: #{_forward_impl.1} parent=1 // pred_region
      %375 = dma.done [#allocation3], 128
    $region21: #{_forward_impl.1} parent=1 // pred_fallthru
      _
    %376 = vsyncpa [#allocation3], 1

</llo_original>
